<compile_context>
chip_gen: v7x
topology: tpu7x:2x2x1
jax: 0.10.0
libtpu: 0.0.40
codegen_flags: <defaults>
</compile_context>

<pallas_src>
import functools

import numpy as np
import jax
import jax.numpy as jnp
from jax import lax
from jax.experimental import pallas as pl
from jax.experimental.pallas import tpu as pltpu


# ----------------------------------------------------------------------------
# Kernel
# ----------------------------------------------------------------------------
def _gcn_kernel(xt_ref, at_ref, wbd_ref, o_ref, *, num_layers, num_edges):
    # xt_ref : (N, Bp*E)           f32  -- x with N on sublanes, (b,f) on lanes
    # at_ref : (K, N, N)           f32  -- A^T per edge ([e, j, n] = A[e][n, j])
    # wbd_ref: (L, K*Bp*E, Bp*E)   f32  -- batch-replicated block-diag weights
    # o_ref  : (N, Bp*E)           f32

    # --- layer-invariant column-L2 normalization (hoisted out of layer loop) --
    # rows of A^T are columns of A;  v / max(||v||, 1e-12)
    #   == v * rsqrt(max(||v||^2, 1e-24))   (sqrt is monotone) -> EUP rsqrt.
    a_t = at_ref[...]                                             # (K, N, N)
    sumsq = jnp.sum(a_t * a_t, axis=2, keepdims=True)             # (K, N, 1)
    a_t = a_t * lax.rsqrt(jnp.maximum(sumsq, 1e-24))

    x_t = xt_ref[...]                                             # (N, Bp*E)

    for l in range(num_layers):
        # --- node aggregation: K lane-aligned dots, lane-concat (no XLU) -----
        # h_e[j, b*E+f] = sum_n A_n[n, j] * x[b, n, f]
        h = jnp.concatenate(
            [jnp.dot(a_t[e], x_t, preferred_element_type=jnp.float32)
             for e in range(num_edges)],
            axis=-1)                                              # (N, K*Bp*E)

        # --- fused projection + concat: one block-diagonal matmul ------------
        # W_bd[l][(e,b,f), (b,e*O+o)] = W[l,e][f,o]  -> z columns are already
        # in the (b, e*O+o) order the next layer consumes: no reshuffle.
        z = jnp.dot(h, wbd_ref[l], preferred_element_type=jnp.float32)
        x_t = jnp.maximum(z, 0.0)                                 # relu, (N, Bp*E)

    o_ref[...] = x_t.astype(o_ref.dtype)


# ----------------------------------------------------------------------------
# One-time weight packing (hoisted out of the per-call path)
# ----------------------------------------------------------------------------
def pack_weights(weights, batch_pad):
    """(L, K, E, O) -> (L, K*Bp*E, Bp*E) batch-replicated block-diagonal."""
    nl, k, emb, out_w = weights.shape
    assert k * out_w == emb, "layer output width must equal emb for stacking"
    bp = batch_pad
    w_np = np.asarray(weights, dtype=np.float32)                  # (L,K,E,O)
    wbd = np.zeros((nl, k * bp * emb, bp * emb), dtype=np.float32)
    for e in range(k):
        for b in range(bp):
            r0 = e * bp * emb + b * emb                           # input  (e,b,f)
            c0 = b * emb + e * out_w                              # output (b,e*O+o)
            wbd[:, r0:r0 + emb, c0:c0 + out_w] = w_np[:, e]
    return jnp.asarray(wbd)


# ----------------------------------------------------------------------------
# Jitted forward (layout plumbing + kernel call, fused under jit)
# ----------------------------------------------------------------------------
@functools.partial(jax.jit, static_argnames=("batch_pad",))
def gcn_forward(x4d, adj, w_bd, *, batch_pad):
    """x4d: (B0, B1, N, E), adj: (K, N, N), w_bd: (L, K*Bp*E, Bp*E)."""
    b0, b1, n, emb = x4d.shape
    k = adj.shape[0]
    nl = w_bd.shape[0]
    b = b0 * b1
    bp = batch_pad
    assert bp >= b and bp * emb % 128 == 0

    # ---- layout plumbing only (no compute hoisted out of the kernel) --------
    # x: (B0,B1,N,E) -> zero-pad batch to Bp -> (N, Bp*E) lane-dense.
    x = x4d.reshape(b, n, emb).astype(jnp.float32)
    x = jnp.pad(x, ((0, bp - b), (0, 0), (0, 0)))                 # padded rows = 0
    xt = x.transpose(1, 0, 2).reshape(n, bp * emb)

    # adjacency transposed per edge so the kernel uses plain row-major dots.
    adj_t = jnp.swapaxes(adj.astype(jnp.float32), 1, 2)           # (K, N, N)

    kernel = functools.partial(_gcn_kernel, num_layers=nl, num_edges=k)

    # Everything (~0.5 MB) fits VMEM; a single resident program, no grid.
    out_t = pl.pallas_call(
        kernel,
        in_specs=[
            pl.BlockSpec(memory_space=pltpu.MemorySpace.VMEM),    # xt
            pl.BlockSpec(memory_space=pltpu.MemorySpace.VMEM),    # adj_t
            pl.BlockSpec(memory_space=pltpu.MemorySpace.VMEM),    # w_bd
        ],
        out_specs=pl.BlockSpec(memory_space=pltpu.MemorySpace.VMEM),
        out_shape=jax.ShapeDtypeStruct((n, bp * emb), jnp.float32),
    )(xt, adj_t, w_bd)

    # back to (B0, B1, N, E); drop the padded batch lanes.
    out = out_t.reshape(n, bp, emb)[:, :b].transpose(1, 0, 2)
    return out.reshape(b0, b1, n, emb)


# ----------------------------------------------------------------------------
# Pure-JAX reference mirroring the PyTorch forward
# ----------------------------------------------------------------------------
def gcn_reference(x4d, adj, weights):
    x = x4d.astype(jnp.float32)
    nl, k = weights.shape[0], adj.shape[0]
    for l in range(nl):
        outs = []
        for e in range(k):
            a_e = adj[e].astype(jnp.float32)
            col_norm = jnp.sqrt(jnp.sum(a_e * a_e, axis=0, keepdims=True))
            a_n = a_e / jnp.maximum(col_norm, 1e-12)
            h = jnp.einsum("nj,abnf->abjf", a_n, x)
            z = jax.nn.relu(jnp.einsum("abjf,fo->abjo", h, weights[l, e]))
            outs.append(z)
        x = jnp.concatenate(outs, axis=-1)
    return x


if __name__ == "__main__":
    # Module-consistent shapes: emb_size=16, use_layers=3, num_edges=2,
    # 16 graph nodes, batch dims (2, 3)  [activation='relu', bias-free Linear].
    EMB = 16
    LAYERS = 3
    EDGES = 2
    NODES = 16
    B0, B1 = 2, 3
    BATCH_PAD = 8          # fold B0*B1=6 -> 8 so Bp*E = 128 (lane-dense)

    key = jax.random.PRNGKey(0)
    k_adj, k_w, k_x = jax.random.split(key, 3)

    # Adjacency: random 0/1 connectivity + self loops (deterministic).
    adj = (jax.random.uniform(k_adj, (EDGES, NODES, NODES)) < 0.3).astype(jnp.float32)
    adj = jnp.clip(adj + jnp.eye(NODES, dtype=jnp.float32)[None], 0.0, 1.0)

    # Linear weights stored (in_dim, out_dim) = (EMB, EMB // EDGES),
    # PyTorch-style uniform(-1/sqrt(fan_in), 1/sqrt(fan_in)) init.
    bound = 1.0 / jnp.sqrt(jnp.float32(EMB))
    weights = jax.random.uniform(
        k_w, (LAYERS, EDGES, EMB, EMB // EDGES),
        minval=-bound, maxval=bound, dtype=jnp.float32)

    x = jax.random.normal(k_x, (B0, B1, NODES, EMB), dtype=jnp.float32)

    # One-time packing (init-time, NOT in the per-call path).
    w_bd = jax.block_until_ready(pack_weights(weights, BATCH_PAD))

    out = jax.block_until_ready(gcn_forward(x, adj, w_bd, batch_pad=BATCH_PAD))
    ref = jax.block_until_ready(gcn_reference(x, adj, weights))

    assert out.shape == (B0, B1, NODES, EMB)
    assert jnp.allclose(out, ref, atol=1e-5, rtol=1e-5), "mismatch vs reference"

    print("KERNEL_OK")
</pallas_src>

<mosaic_0001>
module attributes {stable_mosaic.version = 11 : i64} {
  func.func @_gcn_kernel(%arg0: memref<16x128xf32, #tpu.memory_space<vmem>>, %arg1: memref<2x16x16xf32, #tpu.memory_space<vmem>>, %arg2: memref<3x256x128xf32, #tpu.memory_space<vmem>>, %arg3: memref<16x128xf32, #tpu.memory_space<vmem>>) attributes {dimension_semantics = [], scalar_prefetch = 0 : i64, scratch_operands = 0 : i64, tpu.core_type = #tpu.core_type<tc>} {
    %c0 = arith.constant 0 : index
    %c0_0 = arith.constant 0 : index
    %c0_1 = arith.constant 0 : index
    %0 = vector.load %arg1[%c0, %c0_0, %c0_1] : memref<2x16x16xf32, #tpu.memory_space<vmem>>, vector<2x16x16xf32>
    %1 = arith.mulf %0, %0 : vector<2x16x16xf32>
    %cst = arith.constant dense<0.000000e+00> : vector<2x16xf32>
    %2 = vector.multi_reduction <add>, %1, %cst [2] : vector<2x16x16xf32> to vector<2x16xf32>
    %3 = vector.shape_cast %2 : vector<2x16xf32> to vector<2x16x1xf32>
    %cst_2 = arith.constant 1.000000e-24 : f32
    %4 = vector.broadcast %cst_2 : f32 to vector<2x16x1xf32>
    %5 = arith.maximumf %3, %4 : vector<2x16x1xf32>
    %6 = math.rsqrt %5 : vector<2x16x1xf32>
    %7 = vector.broadcast %6 : vector<2x16x1xf32> to vector<2x16x16xf32>
    %8 = arith.mulf %0, %7 : vector<2x16x16xf32>
    %c0_3 = arith.constant 0 : index
    %c0_4 = arith.constant 0 : index
    %9 = vector.load %arg0[%c0_3, %c0_4] : memref<16x128xf32, #tpu.memory_space<vmem>>, vector<16x128xf32>
    %10 = vector.extract_strided_slice %8 {offsets = [0, 0, 0], sizes = [1, 16, 16], strides = [1, 1, 1]} : vector<2x16x16xf32> to vector<1x16x16xf32>
    %11 = vector.shape_cast %10 : vector<1x16x16xf32> to vector<16x16xf32>
    %cst_5 = arith.constant dense<0.000000e+00> : vector<16x128xf32>
    %12 = tpu.matmul %11, %9, %cst_5 {dimension_numbers = #tpu.dot_dimension_numbers<[1], [0], [0], [1], [0, 0, 1, 1], [], []>} : vector<16x16xf32>, vector<16x128xf32>, vector<16x128xf32> -> vector<16x128xf32>
    %13 = vector.extract_strided_slice %8 {offsets = [1, 0, 0], sizes = [1, 16, 16], strides = [1, 1, 1]} : vector<2x16x16xf32> to vector<1x16x16xf32>
    %14 = vector.shape_cast %13 : vector<1x16x16xf32> to vector<16x16xf32>
    %cst_6 = arith.constant dense<0.000000e+00> : vector<16x128xf32>
    %15 = tpu.matmul %14, %9, %cst_6 {dimension_numbers = #tpu.dot_dimension_numbers<[1], [0], [0], [1], [0, 0, 1, 1], [], []>} : vector<16x16xf32>, vector<16x128xf32>, vector<16x128xf32> -> vector<16x128xf32>
    %16 = tpu.concatenate %12, %15 in 1 : vector<16x128xf32>, vector<16x128xf32> -> vector<16x256xf32>
    %c0_7 = arith.constant 0 : index
    %c0_8 = arith.constant 0 : index
    %c0_9 = arith.constant 0 : index
    %17 = vector.load %arg2[%c0_7, %c0_8, %c0_9] : memref<3x256x128xf32, #tpu.memory_space<vmem>>, vector<1x256x128xf32>
    %18 = vector.shape_cast %17 : vector<1x256x128xf32> to vector<256x128xf32>
    %cst_10 = arith.constant dense<0.000000e+00> : vector<16x128xf32>
    %19 = tpu.matmul %16, %18, %cst_10 {dimension_numbers = #tpu.dot_dimension_numbers<[1], [0], [0], [1], [0, 0, 1, 1], [], []>} : vector<16x256xf32>, vector<256x128xf32>, vector<16x128xf32> -> vector<16x128xf32>
    %cst_11 = arith.constant 0.000000e+00 : f32
    %20 = vector.broadcast %cst_11 : f32 to vector<16x128xf32>
    %21 = arith.maximumf %19, %20 : vector<16x128xf32>
    %22 = vector.extract_strided_slice %8 {offsets = [0, 0, 0], sizes = [1, 16, 16], strides = [1, 1, 1]} : vector<2x16x16xf32> to vector<1x16x16xf32>
    %23 = vector.shape_cast %22 : vector<1x16x16xf32> to vector<16x16xf32>
    %cst_12 = arith.constant dense<0.000000e+00> : vector<16x128xf32>
    %24 = tpu.matmul %23, %21, %cst_12 {dimension_numbers = #tpu.dot_dimension_numbers<[1], [0], [0], [1], [0, 0, 1, 1], [], []>} : vector<16x16xf32>, vector<16x128xf32>, vector<16x128xf32> -> vector<16x128xf32>
    %25 = vector.extract_strided_slice %8 {offsets = [1, 0, 0], sizes = [1, 16, 16], strides = [1, 1, 1]} : vector<2x16x16xf32> to vector<1x16x16xf32>
    %26 = vector.shape_cast %25 : vector<1x16x16xf32> to vector<16x16xf32>
    %cst_13 = arith.constant dense<0.000000e+00> : vector<16x128xf32>
    %27 = tpu.matmul %26, %21, %cst_13 {dimension_numbers = #tpu.dot_dimension_numbers<[1], [0], [0], [1], [0, 0, 1, 1], [], []>} : vector<16x16xf32>, vector<16x128xf32>, vector<16x128xf32> -> vector<16x128xf32>
    %28 = tpu.concatenate %24, %27 in 1 : vector<16x128xf32>, vector<16x128xf32> -> vector<16x256xf32>
    %c1 = arith.constant 1 : index
    %c0_14 = arith.constant 0 : index
    %c0_15 = arith.constant 0 : index
    %29 = vector.load %arg2[%c1, %c0_14, %c0_15] : memref<3x256x128xf32, #tpu.memory_space<vmem>>, vector<1x256x128xf32>
    %30 = vector.shape_cast %29 : vector<1x256x128xf32> to vector<256x128xf32>
    %cst_16 = arith.constant dense<0.000000e+00> : vector<16x128xf32>
    %31 = tpu.matmul %28, %30, %cst_16 {dimension_numbers = #tpu.dot_dimension_numbers<[1], [0], [0], [1], [0, 0, 1, 1], [], []>} : vector<16x256xf32>, vector<256x128xf32>, vector<16x128xf32> -> vector<16x128xf32>
    %cst_17 = arith.constant 0.000000e+00 : f32
    %32 = vector.broadcast %cst_17 : f32 to vector<16x128xf32>
    %33 = arith.maximumf %31, %32 : vector<16x128xf32>
    %34 = vector.extract_strided_slice %8 {offsets = [0, 0, 0], sizes = [1, 16, 16], strides = [1, 1, 1]} : vector<2x16x16xf32> to vector<1x16x16xf32>
    %35 = vector.shape_cast %34 : vector<1x16x16xf32> to vector<16x16xf32>
    %cst_18 = arith.constant dense<0.000000e+00> : vector<16x128xf32>
    %36 = tpu.matmul %35, %33, %cst_18 {dimension_numbers = #tpu.dot_dimension_numbers<[1], [0], [0], [1], [0, 0, 1, 1], [], []>} : vector<16x16xf32>, vector<16x128xf32>, vector<16x128xf32> -> vector<16x128xf32>
    %37 = vector.extract_strided_slice %8 {offsets = [1, 0, 0], sizes = [1, 16, 16], strides = [1, 1, 1]} : vector<2x16x16xf32> to vector<1x16x16xf32>
    %38 = vector.shape_cast %37 : vector<1x16x16xf32> to vector<16x16xf32>
    %cst_19 = arith.constant dense<0.000000e+00> : vector<16x128xf32>
    %39 = tpu.matmul %38, %33, %cst_19 {dimension_numbers = #tpu.dot_dimension_numbers<[1], [0], [0], [1], [0, 0, 1, 1], [], []>} : vector<16x16xf32>, vector<16x128xf32>, vector<16x128xf32> -> vector<16x128xf32>
    %40 = tpu.concatenate %36, %39 in 1 : vector<16x128xf32>, vector<16x128xf32> -> vector<16x256xf32>
    %c2 = arith.constant 2 : index
    %c0_20 = arith.constant 0 : index
    %c0_21 = arith.constant 0 : index
    %41 = vector.load %arg2[%c2, %c0_20, %c0_21] : memref<3x256x128xf32, #tpu.memory_space<vmem>>, vector<1x256x128xf32>
    %42 = vector.shape_cast %41 : vector<1x256x128xf32> to vector<256x128xf32>
    %cst_22 = arith.constant dense<0.000000e+00> : vector<16x128xf32>
    %43 = tpu.matmul %40, %42, %cst_22 {dimension_numbers = #tpu.dot_dimension_numbers<[1], [0], [0], [1], [0, 0, 1, 1], [], []>} : vector<16x256xf32>, vector<256x128xf32>, vector<16x128xf32> -> vector<16x128xf32>
    %cst_23 = arith.constant 0.000000e+00 : f32
    %44 = vector.broadcast %cst_23 : f32 to vector<16x128xf32>
    %45 = arith.maximumf %43, %44 : vector<16x128xf32>
    %c0_24 = arith.constant 0 : index
    %c0_25 = arith.constant 0 : index
    %46 = vector.load %arg3[%c0_24, %c0_25] : memref<16x128xf32, #tpu.memory_space<vmem>>, vector<16x128xf32>
    tpu.vector_store %arg3[%c0_24, %c0_25], %45 {strides = array<i32>} : memref<16x128xf32, #tpu.memory_space<vmem>>, vector<16x128xf32>,
    return
  }
}

</mosaic_0001>

<llo_original>
// kernel: gcn_forward.1
$region0: #{gcn_forward.1}
  #allocation0 [shape = 'u32[]', space=smem, size = 0x4, offset = 0x4, fixed_abs, tag = 'smem constant byte address 0x4 - core index']
  #allocation1 [shape = 'u32[144,128]{1,0:T(1,128)}', space=vmem, size = 0x12000, scoped, tag = 'internal scratch']
  %s0 = inlined_call_operand.vmem [shape: f32[16,128], index: 0, kind: input, shape index: {}]
  %s1 = inlined_call_operand.vmem [shape: f32[2,16,16], index: 1, kind: input, shape index: {}]
  %s2 = inlined_call_operand.hbm [shape: f32[3,256,128], index: 2, kind: input, shape index: {}]
  %s3 = inlined_call_operand.vmem [shape: f32[16,128], index: 3, kind: output, shape index: {}]
  %s4 = sld [smem:[#allocation0]]
  $region26: #{gcn_forward.1} parent=0
    _
  %s6 = ssub.s32 1, %s4
  %s7 = scalar_select 0, %s6, %s4
  $region1: #{gcn_forward.1} parent=0
    #allocation2 [shape = 'u8[393216]{0}', space=vmem, size = 0x60000, scoped, tag = 'input window, operand 2, single buffered']
    #allocation3 [shape = 's32[1]{0}', space=sflag, size = 0x4, scoped, tag = 'scoped memory for gcn_forward.1']
    %8 = vsyncpa [#allocation3], 0
    // Predicated region
    $region2: #{gcn_forward.1} parent=1 // pred_check
      _
    $region3: #{gcn_forward.1} parent=1 // pred_check_branch
      %10 = sbr.rel (0) target = $region5
    $region4: #{gcn_forward.1} parent=1 // pred_region
      _
    $region5: #{gcn_forward.1} parent=1 // pred_fallthru
      _
    // Predicated region
    $region6: #{gcn_forward.1} parent=1 // pred_check
      _
    $region7: #{gcn_forward.1} parent=1 // pred_check_branch
      %12 = sbr.rel (0) target = $region9
    $region8: #{gcn_forward.1} parent=1 // pred_region
      _
    $region9: #{gcn_forward.1} parent=1 // pred_fallthru
      _
    // Predicated region
    $region10: #{gcn_forward.1} parent=1 // pred_check
      _
    $region11: #{gcn_forward.1} parent=1 // pred_check_branch
      %14 = sbr.rel (0) target = $region13
    $region12: #{gcn_forward.1} parent=1 // pred_region
      %s16 = ssub.s32 12288, 12288
      %17 = vsyncadd [#allocation3], %s16
      %s18 = sshll.u32 [#allocation2], 4
      %s19 = int_to_ptr.vmem [resolvable:$true] %s18
      %24 = dma.hbm_to_vmem [thread:$0]  %s2, 12288, %s19, [#allocation3], 128, 128, 8
    $region13: #{gcn_forward.1} parent=1 // pred_fallthru
      _
    // Predicated region
    $region14: #{gcn_forward.1} parent=1 // pred_check
      _
    $region15: #{gcn_forward.1} parent=1 // pred_check_branch
      %26 = sbr.rel (0) target = $region17
    $region16: #{gcn_forward.1} parent=1 // pred_region
      %27 = dma.done [#allocation3], 12288
    $region17: #{gcn_forward.1} parent=1 // pred_fallthru
      _
    %v28 = vld [vmem:[%s1] sm:$0xff]
    %v29 = vld [vmem:[%s1 + $0x8] sm:$0xff]
    %v30 = vld [vmem:[%s1 + $0x10] sm:$0xff]
    %v31 = vld [vmem:[%s1 + $0x18] sm:$0xff]
    %v32 = vmul.f32 %v28, %v28
    %v33 = vmul.f32 %v29, %v29
    %v34 = vmul.f32 %v30, %v30
    %v35 = vmul.f32 %v31, %v31
    %vm36 = vcmask 130048
    %v37 = vsel %vm36, %v32, 0.0
    %38 = vadd.xlane.f32.xlu0 %v37
    %v39 = vpop.xlane.xlu0 %38
    %v40 = vsel %vm36, %v33, 0.0
    %41 = vadd.xlane.f32.xlu0 %v40
    %v42 = vpop.xlane.xlu0 %41
    %v43 = vsel %vm36, %v34, 0.0
    %44 = vadd.xlane.f32.xlu0 %v43
    %v45 = vpop.xlane.xlu0 %44
    %v46 = vsel %vm36, %v35, 0.0
    %47 = vadd.xlane.f32.xlu0 %v46
    %v48 = vpop.xlane.xlu0 %47
    %v49 = vmax.f32 %v39, 1e-24
    %v50 = vmax.f32 %v42, 1e-24
    %v51 = vmax.f32 %v45, 1e-24
    %v52 = vmax.f32 %v48, 1e-24
    %v53 = vrsqrt.pop %v49
    %v54 = vrsqrt.pop %v50
    %v55 = vrsqrt.pop %v51
    %v56 = vrsqrt.pop %v52
    %v57 = vmul.f32 %v28, %v53
    %v58 = vmul.f32 %v29, %v54
    %v59 = vmul.f32 %v30, %v55
    %v60 = vmul.f32 %v31, %v56
    %v61 = vld [vmem:[%s0] sm:$0xff]
    %v62 = vld [vmem:[%s0 + $0x8] sm:$0xff]
    %v64 = vsel %vm36, %v57, 0
    %v67 = vsel %vm36, %v58, 0
    %69 = vmatprep.subr.mxu0 0.0
    %70 = vmatpush1.msra.mxu0 %v61
    %71 = vmatprep.subr.mxu0 0.0
    %72 = vmatpush1.msra.mxu0 %v62
    %73 = vmatprep.subr.mxu0 0.0
    %74 = vmatpush1.msra.mxu0 0.0
    %75 = vmatprep.subr.mxu0 0.0
    %76 = vmatpush1.msra.mxu0 0.0
    %77 = vmatprep.subr.mxu0 0.0
    %78 = vmatpush1.msra.mxu0 0.0
    %79 = vmatprep.subr.mxu0 0.0
    %80 = vmatpush1.msra.mxu0 0.0
    %81 = vmatprep.subr.mxu0 0.0
    %82 = vmatpush1.msra.mxu0 0.0
    %83 = vmatprep.subr.mxu0 0.0
    %84 = vmatpush1.msra.mxu0 0.0
    %85 = vmatprep.subr.mxu0 0.0
    %86 = vmatpush1.msra.mxu0 0.0
    %87 = vmatprep.subr.mxu0 0.0
    %88 = vmatpush1.msra.mxu0 0.0
    %89 = vmatprep.subr.mxu0 0.0
    %90 = vmatpush1.msra.mxu0 0.0
    %91 = vmatprep.subr.mxu0 0.0
    %92 = vmatpush1.msra.mxu0 0.0
    %93 = vmatprep.subr.mxu0 0.0
    %94 = vmatpush1.msra.mxu0 0.0
    %95 = vmatprep.subr.mxu0 0.0
    %96 = vmatpush1.msra.mxu0 0.0
    %97 = vmatprep.subr.mxu0 0.0
    %98 = vmatpush1.msra.mxu0 0.0
    %99 = vmatprep.subr.mxu0 0.0
    %100 = vmatpush1.msra.mxu0 0.0
    %101 = vmatprep.subr.mxu0 0.0
    %102 = vmatpush1.msra.mxu0 0.0
    %103 = vmatprep.subr.mxu0 0.0
    %104 = vmatpush1.msra.mxu0 0.0
    %105 = vmatprep.subr.mxu0 0.0
    %106 = vmatpush1.msra.mxu0 0.0
    %107 = vmatprep.subr.mxu0 0.0
    %108 = vmatpush1.msra.mxu0 0.0
    %109 = vmatprep.subr.mxu0 0.0
    %110 = vmatpush1.msra.mxu0 0.0
    %111 = vmatprep.subr.mxu0 0.0
    %112 = vmatpush1.msra.mxu0 0.0
    %113 = vmatprep.subr.mxu0 0.0
    %114 = vmatpush1.msra.mxu0 0.0
    %115 = vmatprep.subr.mxu0 0.0
    %116 = vmatpush1.msra.mxu0 0.0
    %117 = vmatprep.subr.mxu0 0.0
    %118 = vmatpush1.msra.mxu0 0.0
    %119 = vmatprep.subr.mxu0 0.0
    %120 = vmatpush1.msra.mxu0 0.0
    %121 = vmatprep.subr.mxu0 0.0
    %122 = vmatpush1.msra.mxu0 0.0
    %123 = vmatprep.subr.mxu0 0.0
    %124 = vmatpush1.msra.mxu0 0.0
    %125 = vmatprep.subr.mxu0 0.0
    %126 = vmatpush1.msra.mxu0 0.0
    %127 = vmatprep.subr.mxu0 0.0
    %128 = vmatpush1.msra.mxu0 0.0
    %129 = vmatprep.subr.mxu0 0.0
    %130 = vmatpush1.msra.mxu0 0.0
    %131 = vmatprep.subr.mxu0 0.0
    %132 = vmatpush1.msra.mxu0 0.0
    %133 = vmatprep.mubr.f32.mxu0 0.0
    %134 = vmatmul.mubr.f32.gmra.mrb[0].mxu0 %v64
    %v135 = vpop.f32.mrb[0].mxu0
    %v136 = vadd.f32 0.0, %v135
    %v137 = vpop.f32.mrb[0].mxu0
    %138 = vmatprep.mubr.f32.mxu0 0.0
    %139 = vmatmul.mubr.f32.gmra.mrb[0].mxu0 %v67
    %v140 = vpop.f32.mrb[0].mxu0
    %v141 = vadd.f32 0.0, %v140
    %v142 = vpop.f32.mrb[0].mxu0
    %143 = vdwg.mxu0
    %v145 = vsel %vm36, %v59, 0
    %v148 = vsel %vm36, %v60, 0
    %150 = vmatprep.subr.mxu0 0.0
    %151 = vmatpush1.msra.mxu0 %v61
    %152 = vmatprep.subr.mxu0 0.0
    %153 = vmatpush1.msra.mxu0 %v62
    %154 = vmatprep.subr.mxu0 0.0
    %155 = vmatpush1.msra.mxu0 0.0
    %156 = vmatprep.subr.mxu0 0.0
    %157 = vmatpush1.msra.mxu0 0.0
    %158 = vmatprep.subr.mxu0 0.0
    %159 = vmatpush1.msra.mxu0 0.0
    %160 = vmatprep.subr.mxu0 0.0
    %161 = vmatpush1.msra.mxu0 0.0
    %162 = vmatprep.subr.mxu0 0.0
    %163 = vmatpush1.msra.mxu0 0.0
    %164 = vmatprep.subr.mxu0 0.0
    %165 = vmatpush1.msra.mxu0 0.0
    %166 = vmatprep.subr.mxu0 0.0
    %167 = vmatpush1.msra.mxu0 0.0
    %168 = vmatprep.subr.mxu0 0.0
    %169 = vmatpush1.msra.mxu0 0.0
    %170 = vmatprep.subr.mxu0 0.0
    %171 = vmatpush1.msra.mxu0 0.0
    %172 = vmatprep.subr.mxu0 0.0
    %173 = vmatpush1.msra.mxu0 0.0
    %174 = vmatprep.subr.mxu0 0.0
    %175 = vmatpush1.msra.mxu0 0.0
    %176 = vmatprep.subr.mxu0 0.0
    %177 = vmatpush1.msra.mxu0 0.0
    %178 = vmatprep.subr.mxu0 0.0
    %179 = vmatpush1.msra.mxu0 0.0
    %180 = vmatprep.subr.mxu0 0.0
    %181 = vmatpush1.msra.mxu0 0.0
    %182 = vmatprep.subr.mxu0 0.0
    %183 = vmatpush1.msra.mxu0 0.0
    %184 = vmatprep.subr.mxu0 0.0
    %185 = vmatpush1.msra.mxu0 0.0
    %186 = vmatprep.subr.mxu0 0.0
    %187 = vmatpush1.msra.mxu0 0.0
    %188 = vmatprep.subr.mxu0 0.0
    %189 = vmatpush1.msra.mxu0 0.0
    %190 = vmatprep.subr.mxu0 0.0
    %191 = vmatpush1.msra.mxu0 0.0
    %192 = vmatprep.subr.mxu0 0.0
    %193 = vmatpush1.msra.mxu0 0.0
    %194 = vmatprep.subr.mxu0 0.0
    %195 = vmatpush1.msra.mxu0 0.0
    %196 = vmatprep.subr.mxu0 0.0
    %197 = vmatpush1.msra.mxu0 0.0
    %198 = vmatprep.subr.mxu0 0.0
    %199 = vmatpush1.msra.mxu0 0.0
    %200 = vmatprep.subr.mxu0 0.0
    %201 = vmatpush1.msra.mxu0 0.0
    %202 = vmatprep.subr.mxu0 0.0
    %203 = vmatpush1.msra.mxu0 0.0
    %204 = vmatprep.subr.mxu0 0.0
    %205 = vmatpush1.msra.mxu0 0.0
    %206 = vmatprep.subr.mxu0 0.0
    %207 = vmatpush1.msra.mxu0 0.0
    %208 = vmatprep.subr.mxu0 0.0
    %209 = vmatpush1.msra.mxu0 0.0
    %210 = vmatprep.subr.mxu0 0.0
    %211 = vmatpush1.msra.mxu0 0.0
    %212 = vmatprep.subr.mxu0 0.0
    %213 = vmatpush1.msra.mxu0 0.0
    %214 = vmatprep.mubr.f32.mxu0 0.0
    %215 = vmatmul.mubr.f32.gmra.mrb[0].mxu0 %v145
    %v216 = vpop.f32.mrb[0].mxu0
    %v217 = vadd.f32 0.0, %v216
    %v218 = vpop.f32.mrb[0].mxu0
    %219 = vmatprep.mubr.f32.mxu0 0.0
    %220 = vmatmul.mubr.f32.gmra.mrb[0].mxu0 %v148
    %v221 = vpop.f32.mrb[0].mxu0
    %v222 = vadd.f32 0.0, %v221
    %v223 = vpop.f32.mrb[0].mxu0
    %224 = vdwg.mxu0
    %v225 = vld [vmem:[#allocation2] sm:$0xff]
    %v226 = vld [vmem:[#allocation2 + $0x8] sm:$0xff]
    %v227 = vld [vmem:[#allocation2 + $0x10] sm:$0xff]
    %v228 = vld [vmem:[#allocation2 + $0x18] sm:$0xff]
    %v229 = vld [vmem:[#allocation2 + $0x20] sm:$0xff]
    %v230 = vld [vmem:[#allocation2 + $0x28] sm:$0xff]
    %v231 = vld [vmem:[#allocation2 + $0x30] sm:$0xff]
    %v232 = vld [vmem:[#allocation2 + $0x38] sm:$0xff]
    %v233 = vld [vmem:[#allocation2 + $0x40] sm:$0xff]
    %v234 = vld [vmem:[#allocation2 + $0x48] sm:$0xff]
    %v235 = vld [vmem:[#allocation2 + $0x50] sm:$0xff]
    %v236 = vld [vmem:[#allocation2 + $0x58] sm:$0xff]
    %v237 = vld [vmem:[#allocation2 + $0x60] sm:$0xff]
    %v238 = vld [vmem:[#allocation2 + $0x68] sm:$0xff]
    %v239 = vld [vmem:[#allocation2 + $0x70] sm:$0xff]
    %v240 = vld [vmem:[#allocation2 + $0x78] sm:$0xff]
    %v241 = vld [vmem:[#allocation2 + $0x80] sm:$0xff]
    %v242 = vld [vmem:[#allocation2 + $0x88] sm:$0xff]
    %v243 = vld [vmem:[#allocation2 + $0x90] sm:$0xff]
    %v244 = vld [vmem:[#allocation2 + $0x98] sm:$0xff]
    %v245 = vld [vmem:[#allocation2 + $0xa0] sm:$0xff]
    %v246 = vld [vmem:[#allocation2 + $0xa8] sm:$0xff]
    %v247 = vld [vmem:[#allocation2 + $0xb0] sm:$0xff]
    %v248 = vld [vmem:[#allocation2 + $0xb8] sm:$0xff]
    %v249 = vld [vmem:[#allocation2 + $0xc0] sm:$0xff]
    %v250 = vld [vmem:[#allocation2 + $0xc8] sm:$0xff]
    %v251 = vld [vmem:[#allocation2 + $0xd0] sm:$0xff]
    %v252 = vld [vmem:[#allocation2 + $0xd8] sm:$0xff]
    %v253 = vld [vmem:[#allocation2 + $0xe0] sm:$0xff]
    %v254 = vld [vmem:[#allocation2 + $0xe8] sm:$0xff]
    %v255 = vld [vmem:[#allocation2 + $0xf0] sm:$0xff]
    %v256 = vld [vmem:[#allocation2 + $0xf8] sm:$0xff]
    %257 = vmatprep.subr.mxu0 0.0
    %258 = vmatpush1.msra.mxu0 %v225
    %259 = vmatprep.subr.mxu0 0.0
    %260 = vmatpush1.msra.mxu0 %v226
    %261 = vmatprep.subr.mxu0 0.0
    %262 = vmatpush1.msra.mxu0 %v227
    %263 = vmatprep.subr.mxu0 0.0
    %264 = vmatpush1.msra.mxu0 %v228
    %265 = vmatprep.subr.mxu0 0.0
    %266 = vmatpush1.msra.mxu0 %v229
    %267 = vmatprep.subr.mxu0 0.0
    %268 = vmatpush1.msra.mxu0 %v230
    %269 = vmatprep.subr.mxu0 0.0
    %270 = vmatpush1.msra.mxu0 %v231
    %271 = vmatprep.subr.mxu0 0.0
    %272 = vmatpush1.msra.mxu0 %v232
    %273 = vmatprep.subr.mxu0 0.0
    %274 = vmatpush1.msra.mxu0 %v233
    %275 = vmatprep.subr.mxu0 0.0
    %276 = vmatpush1.msra.mxu0 %v234
    %277 = vmatprep.subr.mxu0 0.0
    %278 = vmatpush1.msra.mxu0 %v235
    %279 = vmatprep.subr.mxu0 0.0
    %280 = vmatpush1.msra.mxu0 %v236
    %281 = vmatprep.subr.mxu0 0.0
    %282 = vmatpush1.msra.mxu0 %v237
    %283 = vmatprep.subr.mxu0 0.0
    %284 = vmatpush1.msra.mxu0 %v238
    %285 = vmatprep.subr.mxu0 0.0
    %286 = vmatpush1.msra.mxu0 %v239
    %287 = vmatprep.subr.mxu0 0.0
    %288 = vmatpush1.msra.mxu0 %v240
    %289 = vmatprep.subr.mxu0 0.0
    %290 = vmatpush1.msra.mxu0 %v241
    %291 = vmatprep.subr.mxu0 0.0
    %292 = vmatpush1.msra.mxu0 %v242
    %293 = vmatprep.subr.mxu0 0.0
    %294 = vmatpush1.msra.mxu0 %v243
    %295 = vmatprep.subr.mxu0 0.0
    %296 = vmatpush1.msra.mxu0 %v244
    %297 = vmatprep.subr.mxu0 0.0
    %298 = vmatpush1.msra.mxu0 %v245
    %299 = vmatprep.subr.mxu0 0.0
    %300 = vmatpush1.msra.mxu0 %v246
    %301 = vmatprep.subr.mxu0 0.0
    %302 = vmatpush1.msra.mxu0 %v247
    %303 = vmatprep.subr.mxu0 0.0
    %304 = vmatpush1.msra.mxu0 %v248
    %305 = vmatprep.subr.mxu0 0.0
    %306 = vmatpush1.msra.mxu0 %v249
    %307 = vmatprep.subr.mxu0 0.0
    %308 = vmatpush1.msra.mxu0 %v250
    %309 = vmatprep.subr.mxu0 0.0
    %310 = vmatpush1.msra.mxu0 %v251
    %311 = vmatprep.subr.mxu0 0.0
    %312 = vmatpush1.msra.mxu0 %v252
    %313 = vmatprep.subr.mxu0 0.0
    %314 = vmatpush1.msra.mxu0 %v253
    %315 = vmatprep.subr.mxu0 0.0
    %316 = vmatpush1.msra.mxu0 %v254
    %317 = vmatprep.subr.mxu0 0.0
    %318 = vmatpush1.msra.mxu0 %v255
    %319 = vmatprep.subr.mxu0 0.0
    %320 = vmatpush1.msra.mxu0 %v256
    %321 = vmatprep.mubr.f32.mxu0 %v217
    %322 = vmatmul.mubr.f32.gmra.mrb[0].mxu0 %v136
    %v323 = vpop.f32.mrb[0].mxu0
    %v324 = vadd.f32 0.0, %v323
    %v325 = vpop.f32.mrb[0].mxu0
    %326 = vmatprep.mubr.f32.mxu0 %v222
    %327 = vmatmul.mubr.f32.gmra.mrb[0].mxu0 %v141
    %v328 = vpop.f32.mrb[0].mxu0
    %v329 = vadd.f32 0.0, %v328
    %v330 = vpop.f32.mrb[0].mxu0
    %331 = vdwg.mxu0
    %v332 = vmax.f32 %v324, 0.0
    %v333 = vmax.f32 %v329, 0.0
    %334 = vmatprep.subr.mxu0 0.0
    %335 = vmatpush1.msra.mxu0 %v332
    %336 = vmatprep.subr.mxu0 0.0
    %337 = vmatpush1.msra.mxu0 %v333
    %338 = vmatprep.subr.mxu0 0.0
    %339 = vmatpush1.msra.mxu0 0.0
    %340 = vmatprep.subr.mxu0 0.0
    %341 = vmatpush1.msra.mxu0 0.0
    %342 = vmatprep.subr.mxu0 0.0
    %343 = vmatpush1.msra.mxu0 0.0
    %344 = vmatprep.subr.mxu0 0.0
    %345 = vmatpush1.msra.mxu0 0.0
    %346 = vmatprep.subr.mxu0 0.0
    %347 = vmatpush1.msra.mxu0 0.0
    %348 = vmatprep.subr.mxu0 0.0
    %349 = vmatpush1.msra.mxu0 0.0
    %350 = vmatprep.subr.mxu0 0.0
    %351 = vmatpush1.msra.mxu0 0.0
    %352 = vmatprep.subr.mxu0 0.0
    %353 = vmatpush1.msra.mxu0 0.0
    %354 = vmatprep.subr.mxu0 0.0
    %355 = vmatpush1.msra.mxu0 0.0
    %356 = vmatprep.subr.mxu0 0.0
    %357 = vmatpush1.msra.mxu0 0.0
    %358 = vmatprep.subr.mxu0 0.0
    %359 = vmatpush1.msra.mxu0 0.0
    %360 = vmatprep.subr.mxu0 0.0
    %361 = vmatpush1.msra.mxu0 0.0
    %362 = vmatprep.subr.mxu0 0.0
    %363 = vmatpush1.msra.mxu0 0.0
    %364 = vmatprep.subr.mxu0 0.0
    %365 = vmatpush1.msra.mxu0 0.0
    %366 = vmatprep.subr.mxu0 0.0
    %367 = vmatpush1.msra.mxu0 0.0
    %368 = vmatprep.subr.mxu0 0.0
    %369 = vmatpush1.msra.mxu0 0.0
    %370 = vmatprep.subr.mxu0 0.0
    %371 = vmatpush1.msra.mxu0 0.0
    %372 = vmatprep.subr.mxu0 0.0
    %373 = vmatpush1.msra.mxu0 0.0
    %374 = vmatprep.subr.mxu0 0.0
    %375 = vmatpush1.msra.mxu0 0.0
    %376 = vmatprep.subr.mxu0 0.0
    %377 = vmatpush1.msra.mxu0 0.0
    %378 = vmatprep.subr.mxu0 0.0
    %379 = vmatpush1.msra.mxu0 0.0
    %380 = vmatprep.subr.mxu0 0.0
    %381 = vmatpush1.msra.mxu0 0.0
    %382 = vmatprep.subr.mxu0 0.0
    %383 = vmatpush1.msra.mxu0 0.0
    %384 = vmatprep.subr.mxu0 0.0
    %385 = vmatpush1.msra.mxu0 0.0
    %386 = vmatprep.subr.mxu0 0.0
    %387 = vmatpush1.msra.mxu0 0.0
    %388 = vmatprep.subr.mxu0 0.0
    %389 = vmatpush1.msra.mxu0 0.0
    %390 = vmatprep.subr.mxu0 0.0
    %391 = vmatpush1.msra.mxu0 0.0
    %392 = vmatprep.subr.mxu0 0.0
    %393 = vmatpush1.msra.mxu0 0.0
    %394 = vmatprep.subr.mxu0 0.0
    %395 = vmatpush1.msra.mxu0 0.0
    %396 = vmatprep.subr.mxu0 0.0
    %397 = vmatpush1.msra.mxu0 0.0
    %398 = vmatprep.mubr.f32.mxu0 0.0
    %399 = vmatmul.mubr.f32.gmra.mrb[0].mxu0 %v64
    %v400 = vpop.f32.mrb[0].mxu0
    %v401 = vadd.f32 0.0, %v400
    %v402 = vpop.f32.mrb[0].mxu0
    %403 = vmatprep.mubr.f32.mxu0 0.0
    %404 = vmatmul.mubr.f32.gmra.mrb[0].mxu0 %v67
    %v405 = vpop.f32.mrb[0].mxu0
    %v406 = vadd.f32 0.0, %v405
    %v407 = vpop.f32.mrb[0].mxu0
    %408 = vdwg.mxu0
    %409 = vmatprep.subr.mxu0 0.0
    %410 = vmatpush1.msra.mxu0 %v332
    %411 = vmatprep.subr.mxu0 0.0
    %412 = vmatpush1.msra.mxu0 %v333
    %413 = vmatprep.subr.mxu0 0.0
    %414 = vmatpush1.msra.mxu0 0.0
    %415 = vmatprep.subr.mxu0 0.0
    %416 = vmatpush1.msra.mxu0 0.0
    %417 = vmatprep.subr.mxu0 0.0
    %418 = vmatpush1.msra.mxu0 0.0
    %419 = vmatprep.subr.mxu0 0.0
    %420 = vmatpush1.msra.mxu0 0.0
    %421 = vmatprep.subr.mxu0 0.0
    %422 = vmatpush1.msra.mxu0 0.0
    %423 = vmatprep.subr.mxu0 0.0
    %424 = vmatpush1.msra.mxu0 0.0
    %425 = vmatprep.subr.mxu0 0.0
    %426 = vmatpush1.msra.mxu0 0.0
    %427 = vmatprep.subr.mxu0 0.0
    %428 = vmatpush1.msra.mxu0 0.0
    %429 = vmatprep.subr.mxu0 0.0
    %430 = vmatpush1.msra.mxu0 0.0
    %431 = vmatprep.subr.mxu0 0.0
    %432 = vmatpush1.msra.mxu0 0.0
    %433 = vmatprep.subr.mxu0 0.0
    %434 = vmatpush1.msra.mxu0 0.0
    %435 = vmatprep.subr.mxu0 0.0
    %436 = vmatpush1.msra.mxu0 0.0
    %437 = vmatprep.subr.mxu0 0.0
    %438 = vmatpush1.msra.mxu0 0.0
    %439 = vmatprep.subr.mxu0 0.0
    %440 = vmatpush1.msra.mxu0 0.0
    %441 = vmatprep.subr.mxu0 0.0
    %442 = vmatpush1.msra.mxu0 0.0
    %443 = vmatprep.subr.mxu0 0.0
    %444 = vmatpush1.msra.mxu0 0.0
    %445 = vmatprep.subr.mxu0 0.0
    %446 = vmatpush1.msra.mxu0 0.0
    %447 = vmatprep.subr.mxu0 0.0
    %448 = vmatpush1.msra.mxu0 0.0
    %449 = vmatprep.subr.mxu0 0.0
    %450 = vmatpush1.msra.mxu0 0.0
    %451 = vmatprep.subr.mxu0 0.0
    %452 = vmatpush1.msra.mxu0 0.0
    %453 = vmatprep.subr.mxu0 0.0
    %454 = vmatpush1.msra.mxu0 0.0
    %455 = vmatprep.subr.mxu0 0.0
    %456 = vmatpush1.msra.mxu0 0.0
    %457 = vmatprep.subr.mxu0 0.0
    %458 = vmatpush1.msra.mxu0 0.0
    %459 = vmatprep.subr.mxu0 0.0
    %460 = vmatpush1.msra.mxu0 0.0
    %461 = vmatprep.subr.mxu0 0.0
    %462 = vmatpush1.msra.mxu0 0.0
    %463 = vmatprep.subr.mxu0 0.0
    %464 = vmatpush1.msra.mxu0 0.0
    %465 = vmatprep.subr.mxu0 0.0
    %466 = vmatpush1.msra.mxu0 0.0
    %467 = vmatprep.subr.mxu0 0.0
    %468 = vmatpush1.msra.mxu0 0.0
    %469 = vmatprep.subr.mxu0 0.0
    %470 = vmatpush1.msra.mxu0 0.0
    %471 = vmatprep.subr.mxu0 0.0
    %472 = vmatpush1.msra.mxu0 0.0
    %473 = vmatprep.mubr.f32.mxu0 0.0
    %474 = vmatmul.mubr.f32.gmra.mrb[0].mxu0 %v145
    %v475 = vpop.f32.mrb[0].mxu0
    %v476 = vadd.f32 0.0, %v475
    %v477 = vpop.f32.mrb[0].mxu0
    %478 = vmatprep.mubr.f32.mxu0 0.0
    %479 = vmatmul.mubr.f32.gmra.mrb[0].mxu0 %v148
    %v480 = vpop.f32.mrb[0].mxu0
    %v481 = vadd.f32 0.0, %v480
    %v482 = vpop.f32.mrb[0].mxu0
    %483 = vdwg.mxu0
    %s484 = scalar_lea.vmem [#allocation2], 256
    %v485 = vld [vmem:[%s484] sm:$0xff]
    %v486 = vld [vmem:[%s484 + $0x8] sm:$0xff]
    %v487 = vld [vmem:[%s484 + $0x10] sm:$0xff]
    %v488 = vld [vmem:[%s484 + $0x18] sm:$0xff]
    %v489 = vld [vmem:[%s484 + $0x20] sm:$0xff]
    %v490 = vld [vmem:[%s484 + $0x28] sm:$0xff]
    %v491 = vld [vmem:[%s484 + $0x30] sm:$0xff]
    %v492 = vld [vmem:[%s484 + $0x38] sm:$0xff]
    %v493 = vld [vmem:[%s484 + $0x40] sm:$0xff]
    %v494 = vld [vmem:[%s484 + $0x48] sm:$0xff]
    %v495 = vld [vmem:[%s484 + $0x50] sm:$0xff]
    %v496 = vld [vmem:[%s484 + $0x58] sm:$0xff]
    %v497 = vld [vmem:[%s484 + $0x60] sm:$0xff]
    %v498 = vld [vmem:[%s484 + $0x68] sm:$0xff]
    %v499 = vld [vmem:[%s484 + $0x70] sm:$0xff]
    %v500 = vld [vmem:[%s484 + $0x78] sm:$0xff]
    %v501 = vld [vmem:[%s484 + $0x80] sm:$0xff]
    %v502 = vld [vmem:[%s484 + $0x88] sm:$0xff]
    %v503 = vld [vmem:[%s484 + $0x90] sm:$0xff]
    %v504 = vld [vmem:[%s484 + $0x98] sm:$0xff]
    %v505 = vld [vmem:[%s484 + $0xa0] sm:$0xff]
    %v506 = vld [vmem:[%s484 + $0xa8] sm:$0xff]
    %v507 = vld [vmem:[%s484 + $0xb0] sm:$0xff]
    %v508 = vld [vmem:[%s484 + $0xb8] sm:$0xff]
    %v509 = vld [vmem:[%s484 + $0xc0] sm:$0xff]
    %v510 = vld [vmem:[%s484 + $0xc8] sm:$0xff]
    %v511 = vld [vmem:[%s484 + $0xd0] sm:$0xff]
    %v512 = vld [vmem:[%s484 + $0xd8] sm:$0xff]
    %v513 = vld [vmem:[%s484 + $0xe0] sm:$0xff]
    %v514 = vld [vmem:[%s484 + $0xe8] sm:$0xff]
    %v515 = vld [vmem:[%s484 + $0xf0] sm:$0xff]
    %v516 = vld [vmem:[%s484 + $0xf8] sm:$0xff]
    %517 = vmatprep.subr.mxu0 0.0
    %518 = vmatpush1.msra.mxu0 %v485
    %519 = vmatprep.subr.mxu0 0.0
    %520 = vmatpush1.msra.mxu0 %v486
    %521 = vmatprep.subr.mxu0 0.0
    %522 = vmatpush1.msra.mxu0 %v487
    %523 = vmatprep.subr.mxu0 0.0
    %524 = vmatpush1.msra.mxu0 %v488
    %525 = vmatprep.subr.mxu0 0.0
    %526 = vmatpush1.msra.mxu0 %v489
    %527 = vmatprep.subr.mxu0 0.0
    %528 = vmatpush1.msra.mxu0 %v490
    %529 = vmatprep.subr.mxu0 0.0
    %530 = vmatpush1.msra.mxu0 %v491
    %531 = vmatprep.subr.mxu0 0.0
    %532 = vmatpush1.msra.mxu0 %v492
    %533 = vmatprep.subr.mxu0 0.0
    %534 = vmatpush1.msra.mxu0 %v493
    %535 = vmatprep.subr.mxu0 0.0
    %536 = vmatpush1.msra.mxu0 %v494
    %537 = vmatprep.subr.mxu0 0.0
    %538 = vmatpush1.msra.mxu0 %v495
    %539 = vmatprep.subr.mxu0 0.0
    %540 = vmatpush1.msra.mxu0 %v496
    %541 = vmatprep.subr.mxu0 0.0
    %542 = vmatpush1.msra.mxu0 %v497
    %543 = vmatprep.subr.mxu0 0.0
    %544 = vmatpush1.msra.mxu0 %v498
    %545 = vmatprep.subr.mxu0 0.0
    %546 = vmatpush1.msra.mxu0 %v499
    %547 = vmatprep.subr.mxu0 0.0
    %548 = vmatpush1.msra.mxu0 %v500
    %549 = vmatprep.subr.mxu0 0.0
    %550 = vmatpush1.msra.mxu0 %v501
    %551 = vmatprep.subr.mxu0 0.0
    %552 = vmatpush1.msra.mxu0 %v502
    %553 = vmatprep.subr.mxu0 0.0
    %554 = vmatpush1.msra.mxu0 %v503
    %555 = vmatprep.subr.mxu0 0.0
    %556 = vmatpush1.msra.mxu0 %v504
    %557 = vmatprep.subr.mxu0 0.0
    %558 = vmatpush1.msra.mxu0 %v505
    %559 = vmatprep.subr.mxu0 0.0
    %560 = vmatpush1.msra.mxu0 %v506
    %561 = vmatprep.subr.mxu0 0.0
    %562 = vmatpush1.msra.mxu0 %v507
    %563 = vmatprep.subr.mxu0 0.0
    %564 = vmatpush1.msra.mxu0 %v508
    %565 = vmatprep.subr.mxu0 0.0
    %566 = vmatpush1.msra.mxu0 %v509
    %567 = vmatprep.subr.mxu0 0.0
    %568 = vmatpush1.msra.mxu0 %v510
    %569 = vmatprep.subr.mxu0 0.0
    %570 = vmatpush1.msra.mxu0 %v511
    %571 = vmatprep.subr.mxu0 0.0
    %572 = vmatpush1.msra.mxu0 %v512
    %573 = vmatprep.subr.mxu0 0.0
    %574 = vmatpush1.msra.mxu0 %v513
    %575 = vmatprep.subr.mxu0 0.0
    %576 = vmatpush1.msra.mxu0 %v514
    %577 = vmatprep.subr.mxu0 0.0
    %578 = vmatpush1.msra.mxu0 %v515
    %579 = vmatprep.subr.mxu0 0.0
    %580 = vmatpush1.msra.mxu0 %v516
    %581 = vmatprep.mubr.f32.mxu0 %v476
    %582 = vmatmul.mubr.f32.gmra.mrb[0].mxu0 %v401
    %v583 = vpop.f32.mrb[0].mxu0
    %v584 = vadd.f32 0.0, %v583
    %v585 = vpop.f32.mrb[0].mxu0
    %586 = vmatprep.mubr.f32.mxu0 %v481
    %587 = vmatmul.mubr.f32.gmra.mrb[0].mxu0 %v406
    %v588 = vpop.f32.mrb[0].mxu0
    %v589 = vadd.f32 0.0, %v588
    %v590 = vpop.f32.mrb[0].mxu0
    %591 = vdwg.mxu0
    %v592 = vmax.f32 %v584, 0.0
    %v593 = vmax.f32 %v589, 0.0
    %594 = vmatprep.subr.mxu0 0.0
    %595 = vmatpush1.msra.mxu0 %v592
    %596 = vmatprep.subr.mxu0 0.0
    %597 = vmatpush1.msra.mxu0 %v593
    %598 = vmatprep.subr.mxu0 0.0
    %599 = vmatpush1.msra.mxu0 0.0
    %600 = vmatprep.subr.mxu0 0.0
    %601 = vmatpush1.msra.mxu0 0.0
    %602 = vmatprep.subr.mxu0 0.0
    %603 = vmatpush1.msra.mxu0 0.0
    %604 = vmatprep.subr.mxu0 0.0
    %605 = vmatpush1.msra.mxu0 0.0
    %606 = vmatprep.subr.mxu0 0.0
    %607 = vmatpush1.msra.mxu0 0.0
    %608 = vmatprep.subr.mxu0 0.0
    %609 = vmatpush1.msra.mxu0 0.0
    %610 = vmatprep.subr.mxu0 0.0
    %611 = vmatpush1.msra.mxu0 0.0
    %612 = vmatprep.subr.mxu0 0.0
    %613 = vmatpush1.msra.mxu0 0.0
    %614 = vmatprep.subr.mxu0 0.0
    %615 = vmatpush1.msra.mxu0 0.0
    %616 = vmatprep.subr.mxu0 0.0
    %617 = vmatpush1.msra.mxu0 0.0
    %618 = vmatprep.subr.mxu0 0.0
    %619 = vmatpush1.msra.mxu0 0.0
    %620 = vmatprep.subr.mxu0 0.0
    %621 = vmatpush1.msra.mxu0 0.0
    %622 = vmatprep.subr.mxu0 0.0
    %623 = vmatpush1.msra.mxu0 0.0
    %624 = vmatprep.subr.mxu0 0.0
    %625 = vmatpush1.msra.mxu0 0.0
    %626 = vmatprep.subr.mxu0 0.0
    %627 = vmatpush1.msra.mxu0 0.0
    %628 = vmatprep.subr.mxu0 0.0
    %629 = vmatpush1.msra.mxu0 0.0
    %630 = vmatprep.subr.mxu0 0.0
    %631 = vmatpush1.msra.mxu0 0.0
    %632 = vmatprep.subr.mxu0 0.0
    %633 = vmatpush1.msra.mxu0 0.0
    %634 = vmatprep.subr.mxu0 0.0
    %635 = vmatpush1.msra.mxu0 0.0
    %636 = vmatprep.subr.mxu0 0.0
    %637 = vmatpush1.msra.mxu0 0.0
    %638 = vmatprep.subr.mxu0 0.0
    %639 = vmatpush1.msra.mxu0 0.0
    %640 = vmatprep.subr.mxu0 0.0
    %641 = vmatpush1.msra.mxu0 0.0
    %642 = vmatprep.subr.mxu0 0.0
    %643 = vmatpush1.msra.mxu0 0.0
    %644 = vmatprep.subr.mxu0 0.0
    %645 = vmatpush1.msra.mxu0 0.0
    %646 = vmatprep.subr.mxu0 0.0
    %647 = vmatpush1.msra.mxu0 0.0
    %648 = vmatprep.subr.mxu0 0.0
    %649 = vmatpush1.msra.mxu0 0.0
    %650 = vmatprep.subr.mxu0 0.0
    %651 = vmatpush1.msra.mxu0 0.0
    %652 = vmatprep.subr.mxu0 0.0
    %653 = vmatpush1.msra.mxu0 0.0
    %654 = vmatprep.subr.mxu0 0.0
    %655 = vmatpush1.msra.mxu0 0.0
    %656 = vmatprep.subr.mxu0 0.0
    %657 = vmatpush1.msra.mxu0 0.0
    %658 = vmatprep.mubr.f32.mxu0 0.0
    %659 = vmatmul.mubr.f32.gmra.mrb[0].mxu0 %v64
    %v660 = vpop.f32.mrb[0].mxu0
    %v661 = vadd.f32 0.0, %v660
    %v662 = vpop.f32.mrb[0].mxu0
    %663 = vmatprep.mubr.f32.mxu0 0.0
    %664 = vmatmul.mubr.f32.gmra.mrb[0].mxu0 %v67
    %v665 = vpop.f32.mrb[0].mxu0
    %v666 = vadd.f32 0.0, %v665
    %v667 = vpop.f32.mrb[0].mxu0
    %668 = vdwg.mxu0
    %669 = vmatprep.subr.mxu0 0.0
    %670 = vmatpush1.msra.mxu0 %v592
    %671 = vmatprep.subr.mxu0 0.0
    %672 = vmatpush1.msra.mxu0 %v593
    %673 = vmatprep.subr.mxu0 0.0
    %674 = vmatpush1.msra.mxu0 0.0
    %675 = vmatprep.subr.mxu0 0.0
    %676 = vmatpush1.msra.mxu0 0.0
    %677 = vmatprep.subr.mxu0 0.0
    %678 = vmatpush1.msra.mxu0 0.0
    %679 = vmatprep.subr.mxu0 0.0
    %680 = vmatpush1.msra.mxu0 0.0
    %681 = vmatprep.subr.mxu0 0.0
    %682 = vmatpush1.msra.mxu0 0.0
    %683 = vmatprep.subr.mxu0 0.0
    %684 = vmatpush1.msra.mxu0 0.0
    %685 = vmatprep.subr.mxu0 0.0
    %686 = vmatpush1.msra.mxu0 0.0
    %687 = vmatprep.subr.mxu0 0.0
    %688 = vmatpush1.msra.mxu0 0.0
    %689 = vmatprep.subr.mxu0 0.0
    %690 = vmatpush1.msra.mxu0 0.0
    %691 = vmatprep.subr.mxu0 0.0
    %692 = vmatpush1.msra.mxu0 0.0
    %693 = vmatprep.subr.mxu0 0.0
    %694 = vmatpush1.msra.mxu0 0.0
    %695 = vmatprep.subr.mxu0 0.0
    %696 = vmatpush1.msra.mxu0 0.0
    %697 = vmatprep.subr.mxu0 0.0
    %698 = vmatpush1.msra.mxu0 0.0
    %699 = vmatprep.subr.mxu0 0.0
    %700 = vmatpush1.msra.mxu0 0.0
    %701 = vmatprep.subr.mxu0 0.0
    %702 = vmatpush1.msra.mxu0 0.0
    %703 = vmatprep.subr.mxu0 0.0
    %704 = vmatpush1.msra.mxu0 0.0
    %705 = vmatprep.subr.mxu0 0.0
    %706 = vmatpush1.msra.mxu0 0.0
    %707 = vmatprep.subr.mxu0 0.0
    %708 = vmatpush1.msra.mxu0 0.0
    %709 = vmatprep.subr.mxu0 0.0
    %710 = vmatpush1.msra.mxu0 0.0
    %711 = vmatprep.subr.mxu0 0.0
    %712 = vmatpush1.msra.mxu0 0.0
    %713 = vmatprep.subr.mxu0 0.0
    %714 = vmatpush1.msra.mxu0 0.0
    %715 = vmatprep.subr.mxu0 0.0
    %716 = vmatpush1.msra.mxu0 0.0
    %717 = vmatprep.subr.mxu0 0.0
    %718 = vmatpush1.msra.mxu0 0.0
    %719 = vmatprep.subr.mxu0 0.0
    %720 = vmatpush1.msra.mxu0 0.0
    %721 = vmatprep.subr.mxu0 0.0
    %722 = vmatpush1.msra.mxu0 0.0
    %723 = vmatprep.subr.mxu0 0.0
    %724 = vmatpush1.msra.mxu0 0.0
    %725 = vmatprep.subr.mxu0 0.0
    %726 = vmatpush1.msra.mxu0 0.0
    %727 = vmatprep.subr.mxu0 0.0
    %728 = vmatpush1.msra.mxu0 0.0
    %729 = vmatprep.subr.mxu0 0.0
    %730 = vmatpush1.msra.mxu0 0.0
    %731 = vmatprep.subr.mxu0 0.0
    %732 = vmatpush1.msra.mxu0 0.0
    %733 = vmatprep.mubr.f32.mxu0 0.0
    %734 = vmatmul.mubr.f32.gmra.mrb[0].mxu0 %v145
    %v735 = vpop.f32.mrb[0].mxu0
    %v736 = vadd.f32 0.0, %v735
    %v737 = vpop.f32.mrb[0].mxu0
    %738 = vmatprep.mubr.f32.mxu0 0.0
    %739 = vmatmul.mubr.f32.gmra.mrb[0].mxu0 %v148
    %v740 = vpop.f32.mrb[0].mxu0
    %v741 = vadd.f32 0.0, %v740
    %v742 = vpop.f32.mrb[0].mxu0
    %743 = vdwg.mxu0
    %s744 = scalar_lea.vmem [#allocation2], 512
    %v745 = vld [vmem:[%s744] sm:$0xff]
    %v746 = vld [vmem:[%s744 + $0x8] sm:$0xff]
    %v747 = vld [vmem:[%s744 + $0x10] sm:$0xff]
    %v748 = vld [vmem:[%s744 + $0x18] sm:$0xff]
    %v749 = vld [vmem:[%s744 + $0x20] sm:$0xff]
    %v750 = vld [vmem:[%s744 + $0x28] sm:$0xff]
    %v751 = vld [vmem:[%s744 + $0x30] sm:$0xff]
    %v752 = vld [vmem:[%s744 + $0x38] sm:$0xff]
    %v753 = vld [vmem:[%s744 + $0x40] sm:$0xff]
    %v754 = vld [vmem:[%s744 + $0x48] sm:$0xff]
    %v755 = vld [vmem:[%s744 + $0x50] sm:$0xff]
    %v756 = vld [vmem:[%s744 + $0x58] sm:$0xff]
    %v757 = vld [vmem:[%s744 + $0x60] sm:$0xff]
    %v758 = vld [vmem:[%s744 + $0x68] sm:$0xff]
    %v759 = vld [vmem:[%s744 + $0x70] sm:$0xff]
    %v760 = vld [vmem:[%s744 + $0x78] sm:$0xff]
    %v761 = vld [vmem:[%s744 + $0x80] sm:$0xff]
    %v762 = vld [vmem:[%s744 + $0x88] sm:$0xff]
    %v763 = vld [vmem:[%s744 + $0x90] sm:$0xff]
    %v764 = vld [vmem:[%s744 + $0x98] sm:$0xff]
    %v765 = vld [vmem:[%s744 + $0xa0] sm:$0xff]
    %v766 = vld [vmem:[%s744 + $0xa8] sm:$0xff]
    %v767 = vld [vmem:[%s744 + $0xb0] sm:$0xff]
    %v768 = vld [vmem:[%s744 + $0xb8] sm:$0xff]
    %v769 = vld [vmem:[%s744 + $0xc0] sm:$0xff]
    %v770 = vld [vmem:[%s744 + $0xc8] sm:$0xff]
    %v771 = vld [vmem:[%s744 + $0xd0] sm:$0xff]
    %v772 = vld [vmem:[%s744 + $0xd8] sm:$0xff]
    %v773 = vld [vmem:[%s744 + $0xe0] sm:$0xff]
    %v774 = vld [vmem:[%s744 + $0xe8] sm:$0xff]
    %v775 = vld [vmem:[%s744 + $0xf0] sm:$0xff]
    %v776 = vld [vmem:[%s744 + $0xf8] sm:$0xff]
    %777 = vmatprep.subr.mxu0 0.0
    %778 = vmatpush1.msra.mxu0 %v745
    %779 = vmatprep.subr.mxu0 0.0
    %780 = vmatpush1.msra.mxu0 %v746
    %781 = vmatprep.subr.mxu0 0.0
    %782 = vmatpush1.msra.mxu0 %v747
    %783 = vmatprep.subr.mxu0 0.0
    %784 = vmatpush1.msra.mxu0 %v748
    %785 = vmatprep.subr.mxu0 0.0
    %786 = vmatpush1.msra.mxu0 %v749
    %787 = vmatprep.subr.mxu0 0.0
    %788 = vmatpush1.msra.mxu0 %v750
    %789 = vmatprep.subr.mxu0 0.0
    %790 = vmatpush1.msra.mxu0 %v751
    %791 = vmatprep.subr.mxu0 0.0
    %792 = vmatpush1.msra.mxu0 %v752
    %793 = vmatprep.subr.mxu0 0.0
    %794 = vmatpush1.msra.mxu0 %v753
    %795 = vmatprep.subr.mxu0 0.0
    %796 = vmatpush1.msra.mxu0 %v754
    %797 = vmatprep.subr.mxu0 0.0
    %798 = vmatpush1.msra.mxu0 %v755
    %799 = vmatprep.subr.mxu0 0.0
    %800 = vmatpush1.msra.mxu0 %v756
    %801 = vmatprep.subr.mxu0 0.0
    %802 = vmatpush1.msra.mxu0 %v757
    %803 = vmatprep.subr.mxu0 0.0
    %804 = vmatpush1.msra.mxu0 %v758
    %805 = vmatprep.subr.mxu0 0.0
    %806 = vmatpush1.msra.mxu0 %v759
    %807 = vmatprep.subr.mxu0 0.0
    %808 = vmatpush1.msra.mxu0 %v760
    %809 = vmatprep.subr.mxu0 0.0
    %810 = vmatpush1.msra.mxu0 %v761
    %811 = vmatprep.subr.mxu0 0.0
    %812 = vmatpush1.msra.mxu0 %v762
    %813 = vmatprep.subr.mxu0 0.0
    %814 = vmatpush1.msra.mxu0 %v763
    %815 = vmatprep.subr.mxu0 0.0
    %816 = vmatpush1.msra.mxu0 %v764
    %817 = vmatprep.subr.mxu0 0.0
    %818 = vmatpush1.msra.mxu0 %v765
    %819 = vmatprep.subr.mxu0 0.0
    %820 = vmatpush1.msra.mxu0 %v766
    %821 = vmatprep.subr.mxu0 0.0
    %822 = vmatpush1.msra.mxu0 %v767
    %823 = vmatprep.subr.mxu0 0.0
    %824 = vmatpush1.msra.mxu0 %v768
    %825 = vmatprep.subr.mxu0 0.0
    %826 = vmatpush1.msra.mxu0 %v769
    %827 = vmatprep.subr.mxu0 0.0
    %828 = vmatpush1.msra.mxu0 %v770
    %829 = vmatprep.subr.mxu0 0.0
    %830 = vmatpush1.msra.mxu0 %v771
    %831 = vmatprep.subr.mxu0 0.0
    %832 = vmatpush1.msra.mxu0 %v772
    %833 = vmatprep.subr.mxu0 0.0
    %834 = vmatpush1.msra.mxu0 %v773
    %835 = vmatprep.subr.mxu0 0.0
    %836 = vmatpush1.msra.mxu0 %v774
    %837 = vmatprep.subr.mxu0 0.0
    %838 = vmatpush1.msra.mxu0 %v775
    %839 = vmatprep.subr.mxu0 0.0
    %840 = vmatpush1.msra.mxu0 %v776
    %841 = vmatprep.mubr.f32.mxu0 %v736
    %842 = vmatmul.mubr.f32.gmra.mrb[0].mxu0 %v661
    %v843 = vpop.f32.mrb[0].mxu0
    %v844 = vadd.f32 0.0, %v843
    %v845 = vpop.f32.mrb[0].mxu0
    %846 = vmatprep.mubr.f32.mxu0 %v741
    %847 = vmatmul.mubr.f32.gmra.mrb[0].mxu0 %v666
    %v848 = vpop.f32.mrb[0].mxu0
    %v849 = vadd.f32 0.0, %v848
    %v850 = vpop.f32.mrb[0].mxu0
    %851 = vdwg.mxu0
    %v852 = vmax.f32 %v844, 0.0
    %v853 = vmax.f32 %v849, 0.0
    %854 = vst [vmem:[%s3] sm:$0xff] %v852
    %855 = vst [vmem:[%s3 + $0x8] sm:$0xff] %v853
    // Predicated region
    $region18: #{gcn_forward.1} parent=1 // pred_check
      _
    $region19: #{gcn_forward.1} parent=1 // pred_check_branch
      %857 = sbr.rel (0) target = $region21
    $region20: #{gcn_forward.1} parent=1 // pred_region
      _
    $region21: #{gcn_forward.1} parent=1 // pred_fallthru
      _
    // Predicated region
    $region22: #{gcn_forward.1} parent=1 // pred_check
      _
    $region23: #{gcn_forward.1} parent=1 // pred_check_branch
      %859 = sbr.rel (0) target = $region25
    $region24: #{gcn_forward.1} parent=1 // pred_region
      _
    $region25: #{gcn_forward.1} parent=1 // pred_fallthru
      _
    %860 = vsyncpa [#allocation3], 1

</llo_original>
